<compile_context>
chip_gen: v7x
topology: tpu7x:2x2x1
jax: 0.10.0
libtpu: 0.0.40
codegen_flags: <defaults>
</compile_context>

<pallas_src>
import functools

import jax
import jax.numpy as jnp
from jax import lax
from jax.experimental import pallas as pl
from jax.experimental.pallas import tpu as pltpu


def _prosodic_kernel(n_bins, pitch_ref, energy_ref, pbins_ref, ebins_ref,
                     emb_ref, out_ref):
    p = pitch_ref[...]           # (M, 1)  f32
    e = energy_ref[...]          # (M, 1)  f32
    pb = pbins_ref[...]          # (1, n_bins - 1) f32, sorted ascending
    eb = ebins_ref[...]          # (1, n_bins - 1) f32, sorted ascending

    # torch.bucketize(v, bins, right=False): index = #{bins strictly < v}.
    pidx = jnp.sum((p > pb).astype(jnp.int32), axis=-1, keepdims=True)   # (M, 1)
    eidx = jnp.sum((e > eb).astype(jnp.int32), axis=-1, keepdims=True)   # (M, 1)

    m = p.shape[0]
    lane = lax.broadcasted_iota(jnp.int32, (m, 2 * n_bins), 1)
    # Disjoint one-hot halves: lanes [0, n_bins) select the pitch row, lanes
    # [n_bins, 2*n_bins) select the energy row; a single matmul against the
    # row-concatenated table therefore returns pitch_reps + energy_reps.
    onehot = ((lane == pidx) | (lane == (eidx + n_bins))).astype(jnp.float32)
    out_ref[...] = jnp.dot(onehot, emb_ref[...],
                           preferred_element_type=jnp.float32)


def discrete_prosodic_forward(x, pitch_bins, energy_bins, pitch_emb, energy_emb):
    """x: (B, L, 2) float32. Returns (B, L, hidden_dim) float32."""
    B, L, _ = x.shape
    n_bins, D = pitch_emb.shape
    M = B * L

    # Wrapper-side layout plumbing (cheap XLA ops, keeps the kernel lane-dense).
    pitch = x[:, :, 0].reshape(M, 1).astype(jnp.float32)
    energy = x[:, :, 1].reshape(M, 1).astype(jnp.float32)
    pbins = pitch_bins.reshape(1, n_bins - 1).astype(jnp.float32)
    ebins = energy_bins.reshape(1, n_bins - 1).astype(jnp.float32)
    emb_cat = jnp.concatenate([pitch_emb, energy_emb], axis=0).astype(jnp.float32)

    def full_spec(shape):
        nd = len(shape)
        return pl.BlockSpec(shape, lambda i, _nd=nd: (0,) * _nd)

    out = pl.pallas_call(
        functools.partial(_prosodic_kernel, n_bins),
        out_shape=jax.ShapeDtypeStruct((M, D), jnp.float32),
        grid=(1,),
        in_specs=[full_spec(pitch.shape), full_spec(energy.shape),
                  full_spec(pbins.shape), full_spec(ebins.shape),
                  full_spec(emb_cat.shape)],
        out_specs=full_spec((M, D)),
        compiler_params=pltpu.CompilerParams(dimension_semantics=("parallel",)),
    )(pitch, energy, pbins, ebins, emb_cat)

    return out.reshape(B, L, D)


def _reference(x, pitch_bins, energy_bins, pitch_emb, energy_emb):
    # Pure-JAX reference of the PyTorch forward (bucketize right=False ==
    # searchsorted side='left').
    pidx = jnp.searchsorted(pitch_bins, x[:, :, 0], side="left")
    eidx = jnp.searchsorted(energy_bins, x[:, :, 1], side="left")
    return pitch_emb[pidx] + energy_emb[eidx]


if __name__ == "__main__":
    config = {
        "prosodic_bins": 32,
        "hidden_dim": 128,
        # TODO(synk): the reference loads pitch/energy min/max from
        # np.load(config['prosodic_stats_path']); stats are synthesized
        # in-script since file I/O is not allowed.
        "prosodic_stats": {"pitch_max": 2.5, "pitch_min": -2.5,
                           "energy_max": 3.0, "energy_min": -3.0},
    }
    n_bins = config["prosodic_bins"]
    D = config["hidden_dim"]
    st = config["prosodic_stats"]

    pitch_bins = jnp.linspace(st["pitch_min"], st["pitch_max"], n_bins - 1,
                              dtype=jnp.float32)
    energy_bins = jnp.linspace(st["energy_min"], st["energy_max"], n_bins - 1,
                               dtype=jnp.float32)

    B, L = 2, 16
    key = jax.random.PRNGKey(0)
    kx, kp, ke = jax.random.split(key, 3)
    x = 1.5 * jax.random.normal(kx, (B, L, 2), dtype=jnp.float32)
    pitch_emb = jax.random.normal(kp, (n_bins, D), dtype=jnp.float32)
    energy_emb = jax.random.normal(ke, (n_bins, D), dtype=jnp.float32)

    out = discrete_prosodic_forward(x, pitch_bins, energy_bins,
                                    pitch_emb, energy_emb)
    out = jax.block_until_ready(out)

    ref = _reference(x, pitch_bins, energy_bins, pitch_emb, energy_emb)
    assert out.shape == (B, L, D)
    assert bool(jnp.all(jnp.isfinite(out)))
    assert bool(jnp.allclose(out, ref, atol=1e-5, rtol=1e-5))
    print("KERNEL_OK")
</pallas_src>

<mosaic_0001>
module attributes {stable_mosaic.version = 11 : i64} {
  func.func @_prosodic_kernel(%arg0: i32, %arg1: memref<32x1xf32, #tpu.memory_space<vmem>>, %arg2: memref<32x1xf32, #tpu.memory_space<vmem>>, %arg3: memref<1x31xf32, #tpu.memory_space<vmem>>, %arg4: memref<1x31xf32, #tpu.memory_space<vmem>>, %arg5: memref<64x128xf32, #tpu.memory_space<vmem>>, %arg6: memref<32x128xf32, #tpu.memory_space<vmem>>) attributes {dimension_semantics = [#tpu.dimension_semantics<parallel>], iteration_bounds = array<i64: 1>, scalar_prefetch = 0 : i64, scratch_operands = 0 : i64, tpu.core_type = #tpu.core_type<tc>, window_params = [{pipeline_mode = #tpu.pipeline_mode<synchronous>, transform_indices = @transform_0, window_bounds = array<i64: 32, 1>}, {pipeline_mode = #tpu.pipeline_mode<synchronous>, transform_indices = @transform_1, window_bounds = array<i64: 32, 1>}, {pipeline_mode = #tpu.pipeline_mode<synchronous>, transform_indices = @transform_2, window_bounds = array<i64: 1, 31>}, {pipeline_mode = #tpu.pipeline_mode<synchronous>, transform_indices = @transform_3, window_bounds = array<i64: 1, 31>}, {pipeline_mode = #tpu.pipeline_mode<synchronous>, transform_indices = @transform_4, window_bounds = array<i64: 64, 128>}, {pipeline_mode = #tpu.pipeline_mode<synchronous>, transform_indices = @transform_5, window_bounds = array<i64: 32, 128>}]} {
    %c0 = arith.constant 0 : index
    %c0_0 = arith.constant 0 : index
    %0 = vector.load %arg1[%c0, %c0_0] : memref<32x1xf32, #tpu.memory_space<vmem>>, vector<32x1xf32>
    %c0_1 = arith.constant 0 : index
    %c0_2 = arith.constant 0 : index
    %1 = vector.load %arg2[%c0_1, %c0_2] : memref<32x1xf32, #tpu.memory_space<vmem>>, vector<32x1xf32>
    %c0_3 = arith.constant 0 : index
    %c0_4 = arith.constant 0 : index
    %2 = vector.load %arg3[%c0_3, %c0_4] : memref<1x31xf32, #tpu.memory_space<vmem>>, vector<1x31xf32>
    %c0_5 = arith.constant 0 : index
    %c0_6 = arith.constant 0 : index
    %3 = vector.load %arg4[%c0_5, %c0_6] : memref<1x31xf32, #tpu.memory_space<vmem>>, vector<1x31xf32>
    %4 = vector.broadcast %0 : vector<32x1xf32> to vector<32x31xf32>
    %5 = vector.broadcast %2 : vector<1x31xf32> to vector<32x31xf32>
    %6 = arith.cmpf ogt, %4, %5 : vector<32x31xf32>
    %7 = arith.extui %6 : vector<32x31xi1> to vector<32x31xi32>
    %cst = arith.constant dense<0> : vector<32xi32>
    %8 = vector.multi_reduction <add>, %7, %cst [1] : vector<32x31xi32> to vector<32xi32>
    %9 = vector.shape_cast %8 : vector<32xi32> to vector<32x1xi32>
    %10 = vector.broadcast %1 : vector<32x1xf32> to vector<32x31xf32>
    %11 = vector.broadcast %3 : vector<1x31xf32> to vector<32x31xf32>
    %12 = arith.cmpf ogt, %10, %11 : vector<32x31xf32>
    %13 = arith.extui %12 : vector<32x31xi1> to vector<32x31xi32>
    %cst_7 = arith.constant dense<0> : vector<32xi32>
    %14 = vector.multi_reduction <add>, %13, %cst_7 [1] : vector<32x31xi32> to vector<32xi32>
    %15 = vector.shape_cast %14 : vector<32xi32> to vector<32x1xi32>
    %16 = tpu.iota {dimensions = array<i32: 1>} : vector<32x64xi32>
    %17 = vector.broadcast %9 : vector<32x1xi32> to vector<32x64xi32>
    %18 = arith.cmpi eq, %16, %17 : vector<32x64xi32>
    %c32_i32 = arith.constant 32 : i32
    %19 = vector.broadcast %c32_i32 : i32 to vector<32x1xi32>
    %20 = arith.addi %15, %19 : vector<32x1xi32>
    %21 = vector.broadcast %20 : vector<32x1xi32> to vector<32x64xi32>
    %22 = arith.cmpi eq, %16, %21 : vector<32x64xi32>
    %23 = arith.ori %18, %22 : vector<32x64xi1>
    %24 = arith.extui %23 : vector<32x64xi1> to vector<32x64xi32>
    %25 = arith.sitofp %24 : vector<32x64xi32> to vector<32x64xf32>
    %c0_8 = arith.constant 0 : index
    %c0_9 = arith.constant 0 : index
    %26 = vector.load %arg5[%c0_8, %c0_9] : memref<64x128xf32, #tpu.memory_space<vmem>>, vector<64x128xf32>
    %cst_10 = arith.constant dense<0.000000e+00> : vector<32x128xf32>
    %27 = tpu.matmul %25, %26, %cst_10 {dimension_numbers = #tpu.dot_dimension_numbers<[1], [0], [0], [1], [0, 0, 1, 1], [], []>} : vector<32x64xf32>, vector<64x128xf32>, vector<32x128xf32> -> vector<32x128xf32>
    %c0_11 = arith.constant 0 : index
    %c0_12 = arith.constant 0 : index
    %28 = vector.load %arg6[%c0_11, %c0_12] : memref<32x128xf32, #tpu.memory_space<vmem>>, vector<32x128xf32>
    tpu.vector_store %arg6[%c0_11, %c0_12], %27 {strides = array<i32>} : memref<32x128xf32, #tpu.memory_space<vmem>>, vector<32x128xf32>,
    return
  }
  func.func @transform_0(%arg0: i32) -> (i32, i32) {
    %c0_i32 = arith.constant 0 : i32
    %c0_i32_0 = arith.constant 0 : i32
    %c0_i32_1 = arith.constant 0 : i32
    return %c0_i32, %c0_i32_0 : i32, i32
  }
  func.func @transform_1(%arg0: i32) -> (i32, i32) {
    %c0_i32 = arith.constant 0 : i32
    %c0_i32_0 = arith.constant 0 : i32
    %c0_i32_1 = arith.constant 0 : i32
    return %c0_i32, %c0_i32_0 : i32, i32
  }
  func.func @transform_2(%arg0: i32) -> (i32, i32) {
    %c0_i32 = arith.constant 0 : i32
    %c0_i32_0 = arith.constant 0 : i32
    %c0_i32_1 = arith.constant 0 : i32
    return %c0_i32, %c0_i32_0 : i32, i32
  }
  func.func @transform_3(%arg0: i32) -> (i32, i32) {
    %c0_i32 = arith.constant 0 : i32
    %c0_i32_0 = arith.constant 0 : i32
    %c0_i32_1 = arith.constant 0 : i32
    return %c0_i32, %c0_i32_0 : i32, i32
  }
  func.func @transform_4(%arg0: i32) -> (i32, i32) {
    %c0_i32 = arith.constant 0 : i32
    %c0_i32_0 = arith.constant 0 : i32
    %c0_i32_1 = arith.constant 0 : i32
    return %c0_i32, %c0_i32_0 : i32, i32
  }
  func.func @transform_5(%arg0: i32) -> (i32, i32) {
    %c0_i32 = arith.constant 0 : i32
    %c0_i32_0 = arith.constant 0 : i32
    %c0_i32_1 = arith.constant 0 : i32
    return %c0_i32, %c0_i32_0 : i32, i32
  }
}

</mosaic_0001>

<llo_original>
// kernel: tpu_custom_call.1
$region0: #{tpu_custom_call.1}
  #allocation0 [shape = 'u32[]', space=smem, size = 0x4, offset = 0x4, fixed_abs, tag = 'smem constant byte address 0x4 - core index']
  #allocation1 [shape = 'u32[144,128]{1,0:T(1,128)}', space=vmem, size = 0x12000, scoped, tag = 'internal scratch']
  %s0 = inlined_call_operand.vmem [shape: f32[32,1], index: 0, kind: input, shape index: {}]
  %s1 = inlined_call_operand.vmem [shape: f32[32,1], index: 1, kind: input, shape index: {}]
  %s2 = inlined_call_operand.vmem [shape: f32[1,31], index: 2, kind: input, shape index: {}]
  %s3 = inlined_call_operand.vmem [shape: f32[1,31], index: 3, kind: input, shape index: {}]
  %s4 = inlined_call_operand.vmem [shape: f32[64,128], index: 4, kind: input, shape index: {}]
  %s5 = inlined_call_operand.hbm [shape: f32[32,128], index: 5, kind: output, shape index: {}]
  %s6 = sld [smem:[#allocation0]]
  $region30: #{tpu_custom_call.1} parent=0
    _
  %s8 = ssub.s32 1, %s6
  %s9 = scalar_select 0, %s8, %s6
  $region1: #{tpu_custom_call.1} parent=0
    #allocation2 [shape = 'u8[16384]{0}', space=vmem, size = 0x4000, scoped, tag = 'output window, operand 0, single buffered']
    #allocation3 [shape = 's32[1]{0}', space=sflag, size = 0x4, scoped, tag = 'scoped memory for tpu_custom_call.1']
    %10 = vsyncpa [#allocation3], 0
    // Predicated region
    $region2: #{tpu_custom_call.1} parent=1 // pred_check
      _
    $region3: #{tpu_custom_call.1} parent=1 // pred_check_branch
      %12 = sbr.rel (0) target = $region5
    $region4: #{tpu_custom_call.1} parent=1 // pred_region
      _
    $region5: #{tpu_custom_call.1} parent=1 // pred_fallthru
      _
    // Predicated region
    $region6: #{tpu_custom_call.1} parent=1 // pred_check
      _
    $region7: #{tpu_custom_call.1} parent=1 // pred_check_branch
      %14 = sbr.rel (0) target = $region9
    $region8: #{tpu_custom_call.1} parent=1 // pred_region
      _
    $region9: #{tpu_custom_call.1} parent=1 // pred_fallthru
      _
    // Predicated region
    $region10: #{tpu_custom_call.1} parent=1 // pred_check
      _
    $region11: #{tpu_custom_call.1} parent=1 // pred_check_branch
      %16 = sbr.rel (0) target = $region13
    $region12: #{tpu_custom_call.1} parent=1 // pred_region
      _
    $region13: #{tpu_custom_call.1} parent=1 // pred_fallthru
      _
    // Predicated region
    $region14: #{tpu_custom_call.1} parent=1 // pred_check
      _
    $region15: #{tpu_custom_call.1} parent=1 // pred_check_branch
      %18 = sbr.rel (0) target = $region17
    $region16: #{tpu_custom_call.1} parent=1 // pred_region
      _
    $region17: #{tpu_custom_call.1} parent=1 // pred_fallthru
      _
    // Predicated region
    $region18: #{tpu_custom_call.1} parent=1 // pred_check
      _
    $region19: #{tpu_custom_call.1} parent=1 // pred_check_branch
      %20 = sbr.rel (0) target = $region21
    $region20: #{tpu_custom_call.1} parent=1 // pred_region
      _
    $region21: #{tpu_custom_call.1} parent=1 // pred_fallthru
      _
    %v21 = vld [vmem:[%s0] sm:$0xff]
    %v22 = vld [vmem:[%s0 + $0x8] sm:$0xff]
    %v23 = vld [vmem:[%s0 + $0x10] sm:$0xff]
    %v24 = vld [vmem:[%s0 + $0x18] sm:$0xff]
    %v25 = vld [vmem:[%s1] sm:$0xff]
    %v26 = vld [vmem:[%s1 + $0x8] sm:$0xff]
    %v27 = vld [vmem:[%s1 + $0x10] sm:$0xff]
    %v28 = vld [vmem:[%s1 + $0x18] sm:$0xff]
    %v29 = vld [vmem:[%s2] sm:$0x1]
    %v30 = vld [vmem:[%s3] sm:$0x1]
    %32 = vset.pattern.permute.xlu0 0
    %33 = vperm.xlu0 %32, %v21
    %v34 = vpop.permute.xlu0 %33
    %37 = vset.pattern.permute.xlu0 0
    %38 = vperm.xlu0 %37, %v22
    %v39 = vpop.permute.xlu0 %38
    %42 = vset.pattern.permute.xlu0 0
    %43 = vperm.xlu0 %42, %v23
    %v44 = vpop.permute.xlu0 %43
    %47 = vset.pattern.permute.xlu0 0
    %48 = vperm.xlu0 %47, %v24
    %v49 = vpop.permute.xlu0 %48
    %v52 = vlaneseq
    %v53 = vshrl.u32 %v52, 7
    %v54 = vsub.s32 0, %v53
    %v55 = vrot.slane %v29, %v54
    %vm57 = vcmp.gt.f32.partialorder %v34, %v55
    %vm58 = vcmp.gt.f32.partialorder %v39, %v55
    %vm59 = vcmp.gt.f32.partialorder %v44, %v55
    %vm60 = vcmp.gt.f32.partialorder %v49, %v55
    %v61 = vsel %vm57, 1, 0
    %v62 = vsel %vm58, 1, 0
    %v63 = vsel %vm59, 1, 0
    %v64 = vsel %vm60, 1, 0
    %vm65 = vcmask 252928
    %v66 = vsel %vm65, %v61, 0
    %v67 = vand.u32 %v66, 65535
    %v68 = vshrl.u32 %v66, 16
    %v69 = vcvt.s32.f32 %v67
    %v70 = vcvt.s32.f32 %v68
    %71 = vadd.xlane.f32.xlu0 %v69
    %v72 = vpop.xlane.xlu0 %71
    %73 = vadd.xlane.f32.xlu0 %v70
    %v74 = vpop.xlane.xlu0 %73
    %v75 = vcvt.f32.s32 %v72
    %v76 = vcvt.f32.s32 %v74
    %v77 = vshll.u32 %v76, 16
    %v78 = vadd.s32 %v77, %v75
    %v79 = vsel %vm65, %v62, 0
    %v80 = vand.u32 %v79, 65535
    %v81 = vshrl.u32 %v79, 16
    %v82 = vcvt.s32.f32 %v80
    %v83 = vcvt.s32.f32 %v81
    %84 = vadd.xlane.f32.xlu0 %v82
    %v85 = vpop.xlane.xlu0 %84
    %86 = vadd.xlane.f32.xlu0 %v83
    %v87 = vpop.xlane.xlu0 %86
    %v88 = vcvt.f32.s32 %v85
    %v89 = vcvt.f32.s32 %v87
    %v90 = vshll.u32 %v89, 16
    %v91 = vadd.s32 %v90, %v88
    %v92 = vsel %vm65, %v63, 0
    %v93 = vand.u32 %v92, 65535
    %v94 = vshrl.u32 %v92, 16
    %v95 = vcvt.s32.f32 %v93
    %v96 = vcvt.s32.f32 %v94
    %97 = vadd.xlane.f32.xlu0 %v95
    %v98 = vpop.xlane.xlu0 %97
    %99 = vadd.xlane.f32.xlu0 %v96
    %v100 = vpop.xlane.xlu0 %99
    %v101 = vcvt.f32.s32 %v98
    %v102 = vcvt.f32.s32 %v100
    %v103 = vshll.u32 %v102, 16
    %v104 = vadd.s32 %v103, %v101
    %v105 = vsel %vm65, %v64, 0
    %v106 = vand.u32 %v105, 65535
    %v107 = vshrl.u32 %v105, 16
    %v108 = vcvt.s32.f32 %v106
    %v109 = vcvt.s32.f32 %v107
    %110 = vadd.xlane.f32.xlu0 %v108
    %v111 = vpop.xlane.xlu0 %110
    %112 = vadd.xlane.f32.xlu0 %v109
    %v113 = vpop.xlane.xlu0 %112
    %v114 = vcvt.f32.s32 %v111
    %v115 = vcvt.f32.s32 %v113
    %v116 = vshll.u32 %v115, 16
    %v117 = vadd.s32 %v116, %v114
    %119 = vset.pattern.permute.xlu0 0
    %120 = vperm.xlu0 %119, %v25
    %v121 = vpop.permute.xlu0 %120
    %124 = vset.pattern.permute.xlu0 0
    %125 = vperm.xlu0 %124, %v26
    %v126 = vpop.permute.xlu0 %125
    %129 = vset.pattern.permute.xlu0 0
    %130 = vperm.xlu0 %129, %v27
    %v131 = vpop.permute.xlu0 %130
    %134 = vset.pattern.permute.xlu0 0
    %135 = vperm.xlu0 %134, %v28
    %v136 = vpop.permute.xlu0 %135
    %v139 = vlaneseq
    %v140 = vshrl.u32 %v139, 7
    %v141 = vsub.s32 0, %v140
    %v142 = vrot.slane %v30, %v141
    %vm144 = vcmp.gt.f32.partialorder %v121, %v142
    %vm145 = vcmp.gt.f32.partialorder %v126, %v142
    %vm146 = vcmp.gt.f32.partialorder %v131, %v142
    %vm147 = vcmp.gt.f32.partialorder %v136, %v142
    %v148 = vsel %vm144, 1, 0
    %v149 = vsel %vm145, 1, 0
    %v150 = vsel %vm146, 1, 0
    %v151 = vsel %vm147, 1, 0
    %v152 = vsel %vm65, %v148, 0
    %v153 = vand.u32 %v152, 65535
    %v154 = vshrl.u32 %v152, 16
    %v155 = vcvt.s32.f32 %v153
    %v156 = vcvt.s32.f32 %v154
    %157 = vadd.xlane.f32.xlu0 %v155
    %v158 = vpop.xlane.xlu0 %157
    %159 = vadd.xlane.f32.xlu0 %v156
    %v160 = vpop.xlane.xlu0 %159
    %v161 = vcvt.f32.s32 %v158
    %v162 = vcvt.f32.s32 %v160
    %v163 = vshll.u32 %v162, 16
    %v164 = vadd.s32 %v163, %v161
    %v165 = vsel %vm65, %v149, 0
    %v166 = vand.u32 %v165, 65535
    %v167 = vshrl.u32 %v165, 16
    %v168 = vcvt.s32.f32 %v166
    %v169 = vcvt.s32.f32 %v167
    %170 = vadd.xlane.f32.xlu0 %v168
    %v171 = vpop.xlane.xlu0 %170
    %172 = vadd.xlane.f32.xlu0 %v169
    %v173 = vpop.xlane.xlu0 %172
    %v174 = vcvt.f32.s32 %v171
    %v175 = vcvt.f32.s32 %v173
    %v176 = vshll.u32 %v175, 16
    %v177 = vadd.s32 %v176, %v174
    %v178 = vsel %vm65, %v150, 0
    %v179 = vand.u32 %v178, 65535
    %v180 = vshrl.u32 %v178, 16
    %v181 = vcvt.s32.f32 %v179
    %v182 = vcvt.s32.f32 %v180
    %183 = vadd.xlane.f32.xlu0 %v181
    %v184 = vpop.xlane.xlu0 %183
    %185 = vadd.xlane.f32.xlu0 %v182
    %v186 = vpop.xlane.xlu0 %185
    %v187 = vcvt.f32.s32 %v184
    %v188 = vcvt.f32.s32 %v186
    %v189 = vshll.u32 %v188, 16
    %v190 = vadd.s32 %v189, %v187
    %v191 = vsel %vm65, %v151, 0
    %v192 = vand.u32 %v191, 65535
    %v193 = vshrl.u32 %v191, 16
    %v194 = vcvt.s32.f32 %v192
    %v195 = vcvt.s32.f32 %v193
    %196 = vadd.xlane.f32.xlu0 %v194
    %v197 = vpop.xlane.xlu0 %196
    %198 = vadd.xlane.f32.xlu0 %v195
    %v199 = vpop.xlane.xlu0 %198
    %v200 = vcvt.f32.s32 %v197
    %v201 = vcvt.f32.s32 %v199
    %v202 = vshll.u32 %v201, 16
    %v203 = vadd.s32 %v202, %v200
    %v204 = vlaneseq
    %v205 = vand.u32 %v204, 127
    %vm206 = vcmp.eq.s32.totalorder %v205, %v78
    %vm207 = vcmp.eq.s32.totalorder %v205, %v91
    %vm208 = vcmp.eq.s32.totalorder %v205, %v104
    %vm209 = vcmp.eq.s32.totalorder %v205, %v117
    %v210 = vadd.s32 %v164, 32
    %v211 = vadd.s32 %v177, 32
    %v212 = vadd.s32 %v190, 32
    %v213 = vadd.s32 %v203, 32
    %vm214 = vcmp.eq.s32.totalorder %v205, %v210
    %vm215 = vcmp.eq.s32.totalorder %v205, %v211
    %vm216 = vcmp.eq.s32.totalorder %v205, %v212
    %vm217 = vcmp.eq.s32.totalorder %v205, %v213
    %vm218 = vmor %vm206, %vm214
    %vm219 = vmor %vm207, %vm215
    %vm220 = vmor %vm208, %vm216
    %vm221 = vmor %vm209, %vm217
    %v222 = vsel %vm218, 1, 0
    %v223 = vsel %vm219, 1, 0
    %v224 = vsel %vm220, 1, 0
    %v225 = vsel %vm221, 1, 0
    %v226 = vcvt.s32.f32 %v222
    %v227 = vcvt.s32.f32 %v223
    %v228 = vcvt.s32.f32 %v224
    %v229 = vcvt.s32.f32 %v225
    %v230 = vld [vmem:[%s4] sm:$0xff]
    %v231 = vld [vmem:[%s4 + $0x8] sm:$0xff]
    %v232 = vld [vmem:[%s4 + $0x10] sm:$0xff]
    %v233 = vld [vmem:[%s4 + $0x18] sm:$0xff]
    %v234 = vld [vmem:[%s4 + $0x20] sm:$0xff]
    %v235 = vld [vmem:[%s4 + $0x28] sm:$0xff]
    %v236 = vld [vmem:[%s4 + $0x30] sm:$0xff]
    %v237 = vld [vmem:[%s4 + $0x38] sm:$0xff]
    %vm238 = vcmask 523264
    %v240 = vsel %vm238, %v226, 0
    %v243 = vsel %vm238, %v227, 0
    %v246 = vsel %vm238, %v228, 0
    %v249 = vsel %vm238, %v229, 0
    %251 = vmatprep.subr.mxu0 0.0
    %252 = vmatpush1.msra.mxu0 %v230
    %253 = vmatprep.subr.mxu0 0.0
    %254 = vmatpush1.msra.mxu0 %v231
    %255 = vmatprep.subr.mxu0 0.0
    %256 = vmatpush1.msra.mxu0 %v232
    %257 = vmatprep.subr.mxu0 0.0
    %258 = vmatpush1.msra.mxu0 %v233
    %259 = vmatprep.subr.mxu0 0.0
    %260 = vmatpush1.msra.mxu0 %v234
    %261 = vmatprep.subr.mxu0 0.0
    %262 = vmatpush1.msra.mxu0 %v235
    %263 = vmatprep.subr.mxu0 0.0
    %264 = vmatpush1.msra.mxu0 %v236
    %265 = vmatprep.subr.mxu0 0.0
    %266 = vmatpush1.msra.mxu0 %v237
    %267 = vmatprep.subr.mxu0 0.0
    %268 = vmatpush1.msra.mxu0 0.0
    %269 = vmatprep.subr.mxu0 0.0
    %270 = vmatpush1.msra.mxu0 0.0
    %271 = vmatprep.subr.mxu0 0.0
    %272 = vmatpush1.msra.mxu0 0.0
    %273 = vmatprep.subr.mxu0 0.0
    %274 = vmatpush1.msra.mxu0 0.0
    %275 = vmatprep.subr.mxu0 0.0
    %276 = vmatpush1.msra.mxu0 0.0
    %277 = vmatprep.subr.mxu0 0.0
    %278 = vmatpush1.msra.mxu0 0.0
    %279 = vmatprep.subr.mxu0 0.0
    %280 = vmatpush1.msra.mxu0 0.0
    %281 = vmatprep.subr.mxu0 0.0
    %282 = vmatpush1.msra.mxu0 0.0
    %283 = vmatprep.subr.mxu0 0.0
    %284 = vmatpush1.msra.mxu0 0.0
    %285 = vmatprep.subr.mxu0 0.0
    %286 = vmatpush1.msra.mxu0 0.0
    %287 = vmatprep.subr.mxu0 0.0
    %288 = vmatpush1.msra.mxu0 0.0
    %289 = vmatprep.subr.mxu0 0.0
    %290 = vmatpush1.msra.mxu0 0.0
    %291 = vmatprep.subr.mxu0 0.0
    %292 = vmatpush1.msra.mxu0 0.0
    %293 = vmatprep.subr.mxu0 0.0
    %294 = vmatpush1.msra.mxu0 0.0
    %295 = vmatprep.subr.mxu0 0.0
    %296 = vmatpush1.msra.mxu0 0.0
    %297 = vmatprep.subr.mxu0 0.0
    %298 = vmatpush1.msra.mxu0 0.0
    %299 = vmatprep.subr.mxu0 0.0
    %300 = vmatpush1.msra.mxu0 0.0
    %301 = vmatprep.subr.mxu0 0.0
    %302 = vmatpush1.msra.mxu0 0.0
    %303 = vmatprep.subr.mxu0 0.0
    %304 = vmatpush1.msra.mxu0 0.0
    %305 = vmatprep.subr.mxu0 0.0
    %306 = vmatpush1.msra.mxu0 0.0
    %307 = vmatprep.subr.mxu0 0.0
    %308 = vmatpush1.msra.mxu0 0.0
    %309 = vmatprep.subr.mxu0 0.0
    %310 = vmatpush1.msra.mxu0 0.0
    %311 = vmatprep.subr.mxu0 0.0
    %312 = vmatpush1.msra.mxu0 0.0
    %313 = vmatprep.subr.mxu0 0.0
    %314 = vmatpush1.msra.mxu0 0.0
    %315 = vmatprep.mubr.f32.mxu0 0.0
    %316 = vmatmul.mubr.f32.gmra.mrb[0].mxu0 %v240
    %v317 = vpop.f32.mrb[0].mxu0
    %v318 = vadd.f32 0.0, %v317
    %v319 = vpop.f32.mrb[0].mxu0
    %320 = vmatprep.mubr.f32.mxu0 0.0
    %321 = vmatmul.mubr.f32.gmra.mrb[0].mxu0 %v243
    %v322 = vpop.f32.mrb[0].mxu0
    %v323 = vadd.f32 0.0, %v322
    %v324 = vpop.f32.mrb[0].mxu0
    %325 = vmatprep.mubr.f32.mxu0 0.0
    %326 = vmatmul.mubr.f32.gmra.mrb[0].mxu0 %v246
    %v327 = vpop.f32.mrb[0].mxu0
    %v328 = vadd.f32 0.0, %v327
    %v329 = vpop.f32.mrb[0].mxu0
    %330 = vmatprep.mubr.f32.mxu0 0.0
    %331 = vmatmul.mubr.f32.gmra.mrb[0].mxu0 %v249
    %v332 = vpop.f32.mrb[0].mxu0
    %v333 = vadd.f32 0.0, %v332
    %v334 = vpop.f32.mrb[0].mxu0
    %335 = vdwg.mxu0
    %336 = vst [vmem:[#allocation2] sm:$0xff] %v318
    %337 = vst [vmem:[#allocation2 + $0x8] sm:$0xff] %v323
    %338 = vst [vmem:[#allocation2 + $0x10] sm:$0xff] %v328
    %339 = vst [vmem:[#allocation2 + $0x18] sm:$0xff] %v333
    // Predicated region
    $region22: #{tpu_custom_call.1} parent=1 // pred_check
      _
    $region23: #{tpu_custom_call.1} parent=1 // pred_check_branch
      %341 = sbr.rel (0) target = $region25
    $region24: #{tpu_custom_call.1} parent=1 // pred_region
      %s343 = ssub.s32 512, 512
      %344 = vsyncadd [#allocation3], %s343
      %s345 = sshll.u32 [#allocation2], 4
      %s346 = int_to_ptr.vmem [resolvable:$true] %s345
      %351 = dma.vmem_to_hbm [thread:$0]  %s346, 512, %s5, [#allocation3], 128, 128, 8
    $region25: #{tpu_custom_call.1} parent=1 // pred_fallthru
      _
    // Predicated region
    $region26: #{tpu_custom_call.1} parent=1 // pred_check
      _
    $region27: #{tpu_custom_call.1} parent=1 // pred_check_branch
      %353 = sbr.rel (0) target = $region29
    $region28: #{tpu_custom_call.1} parent=1 // pred_region
      %354 = dma.done [#allocation3], 512
    $region29: #{tpu_custom_call.1} parent=1 // pred_fallthru
      _
    %355 = vsyncpa [#allocation3], 1

</llo_original>
